<compile_context>
chip_gen: v5e
topology: v5e:2x2
jax: 0.10.0
libtpu: 0.0.40
codegen_flags: <defaults>
</compile_context>

<pallas_src>
import functools

import jax
import jax.numpy as jnp
from jax.experimental import pallas as pl
from jax.experimental.pallas import tpu as pltpu


def _conv_stats_kernel(x_ref, w_ref, y_ref, stats_ref, *,
                       K, dil_lanes, pad_lanes, span, fuse_taps, cdt):
    """Temporal conv for one block of samples + per-block batch-stat partials.

    x_ref:     (Nb, C_tap, TV)    input dtype, lane-dense (T*V on lanes)
    w_ref:     (C_out, K*C_tap)   compute dtype, tap-major rows
    y_ref:     (Nb, C_out, span)  pre-BN conv output (bf16 / f32)
    stats_ref: (1, C_out, 2)      f32 per-block (sum, sum_sq) partials
    """
    Nb, C_tap, TV = x_ref.shape
    C_out = w_ref.shape[0]
    KC = K * C_tap

    xv = x_ref[...].astype(cdt)          # in-kernel cast: no extra HBM pass
    w = w_ref[...]

    def tap(k):
        # Shifted temporal tap with the conv zero padding folded in:
        # lanes [lo, lo+span) of the unpadded sample, zeros outside.
        lo = k * dil_lanes - pad_lanes
        hi = lo + span
        pieces = []
        if lo < 0:
            pieces.append(jnp.zeros((Nb, C_tap, -lo), dtype=cdt))
        lo_c, hi_c = max(lo, 0), min(hi, TV)
        if hi_c > lo_c:
            pieces.append(xv[:, :, lo_c:hi_c])
        if hi > TV:
            pieces.append(jnp.zeros((Nb, C_tap, hi - TV), dtype=cdt))
        return pieces[0] if len(pieces) == 1 else jnp.concatenate(pieces, axis=-1)

    dn = (((2,), (1,)), ((0,), (0,)))    # batched (over Nb) matmul
    if fuse_taps or K == 1:
        # v5e/v6e: one fused im2col contraction -> single MXU drain per block.
        taps = [tap(k) for k in range(K)]
        cols = taps[0] if K == 1 else jnp.concatenate(taps, axis=1)
        wb = jnp.broadcast_to(w[None], (Nb, C_out, KC))
        acc = jax.lax.dot_general(wb, cols, dn,
                                  preferred_element_type=jnp.float32)
    else:
        # v7x: per-tap accumulating matmuls (MRB), no im2col concat buffer.
        acc = None
        for k in range(K):
            wk = jnp.broadcast_to(w[None, :, k * C_tap:(k + 1) * C_tap],
                                  (Nb, C_out, C_tap))
            part = jax.lax.dot_general(wk, tap(k), dn,
                                       preferred_element_type=jnp.float32)
            acc = part if acc is None else acc + part

    y_ref[...] = acc.astype(y_ref.dtype)

    # Batch-stat partials, reduced ONCE over the whole block (not per sample).
    acc_c = jnp.sum(acc, axis=0)                    # (C_out, span)
    sq_c = jnp.sum(acc * acc, axis=0)               # (C_out, span)
    s = jnp.sum(acc_c, axis=-1, keepdims=True)      # (C_out, 1)
    q = jnp.sum(sq_c, axis=-1, keepdims=True)       # (C_out, 1)
    # NOTE: kept as (C_out, 2) (C_out on sublanes) — acc keeps C_out on the
    # sublane axis, so a lane-major (2, C_out) row would need an in-kernel
    # transpose costing more than the 2-lane store it saves (2*C_out floats).
    stats_ref[...] = jnp.concatenate([s, q], axis=-1)[None]


def _bn_apply_kernel(y_ref, ss_ref, o_ref):
    """out = y * scale + shift; ss_ref packs (scale, shift) as one (C_out, 2)."""
    ss = ss_ref[...]
    scale = ss[:, 0:1][None]                        # (1, C_out, 1)
    shift = ss[:, 1:2][None]
    o_ref[...] = (y_ref[...].astype(jnp.float32) * scale + shift
                  ).astype(o_ref.dtype)


def _vmem_capacity_bytes():
    try:
        return int(pltpu.get_tpu_info().vmem_capacity_bytes)
    except Exception:
        return 64 << 20                              # conservative fallback


def _pick_samples_per_block(n, cap):
    """Largest divisor of n <= cap, preferring an even (then >= 2) grid."""
    cap = max(1, min(n, cap))
    best, best_score = 1, -1
    for nb in range(cap, 0, -1):
        if n % nb:
            continue
        g = n // nb
        score = 2 if (g >= 2 and g % 2 == 0) else (1 if g >= 2 else 0)
        if score > best_score:
            best, best_score = nb, score
        if score == 2:
            break
    return best


def temporal_conv_forward(x, weight, bias, gamma, beta, kernel_size,
                          stride=1, dilation=1, eps=1e-5,
                          compute_dtype=jnp.bfloat16):
    """Forward of TemporalConv: Conv2d (K,1), stride (s,1), dilation (d,1) + BN2d."""
    N, C_in, T, V = x.shape
    C_out = weight.shape[0]
    K = int(kernel_size)
    pad = (K + (K - 1) * (dilation - 1) - 1) // 2
    T_out = (T + 2 * pad - dilation * (K - 1) - 1) // stride + 1
    span = T_out * V
    cdt = jnp.dtype(compute_dtype)
    y_dt = jnp.float32 if cdt == jnp.dtype(jnp.float32) else jnp.bfloat16

    # Conv bias is exactly cancelled by training-mode BN (see header note).
    del bias

    # Tap-major flattened weight: row layout (k*C_in + c) matches the RHS stack.
    w_flat = jnp.transpose(weight, (0, 2, 1)).reshape(C_out, K * C_in).astype(cdt)

    if stride == 1:
        # Lane-dense, unpadded, uncast: pad + cast are folded into pass 1 so x
        # never takes an extra HBM round trip before the kernel.
        x_in = x.reshape(N, C_in, T * V)
        Kk, C_tap, TVl = K, C_in, T * V
        dil_lanes, pad_lanes = dilation * V, pad * V
    else:
        # stride > 1: im2col once in the wrapper; cast FIRST so the K-times
        # larger im2col buffer is built in the compute dtype, not f32.
        xp = jnp.pad(x.astype(cdt), ((0, 0), (0, 0), (pad, pad), (0, 0)))
        taps = [xp[:, :, k * dilation: k * dilation
                   + (T_out - 1) * stride + 1: stride, :] for k in range(K)]
        x_in = jnp.concatenate(taps, axis=1).reshape(N, K * C_in, span)
        Kk, C_tap, TVl = 1, K * C_in, span
        dil_lanes, pad_lanes = 0, 0
        # TODO(synk): an in-kernel strided im2col would avoid the K x HBM read
        # amplification of the wrapper-side gather for stride > 1.

    # ---- per-generation block sizing & VMEM limits ------------------------
    vmem_cap = _vmem_capacity_bytes()
    if vmem_cap >= (96 << 20):          # v4/v5e/v5p/v6e class: 128 MiB / TC
        block_budget, vmem_limit, fuse_taps = 88 << 20, 100 << 20, True
    elif vmem_cap >= (48 << 20):        # v7x class: 64 MiB / TC
        block_budget, vmem_limit, fuse_taps = 40 << 20, 48 << 20, False
    else:                               # unknown / small-VMEM fallback
        block_budget = max(4 << 20, vmem_cap // 2)
        vmem_limit = max(8 << 20, (vmem_cap * 3) // 4)
        fuse_taps = True

    xb = jnp.dtype(x_in.dtype).itemsize
    cs = cdt.itemsize
    yb = jnp.dtype(y_dt).itemsize
    KC = K * C_in
    per_sample = (2 * C_tap * TVl * xb       # x block, double-buffered
                  + C_tap * TVl * cs         # in-kernel cast copy
                  + 2 * KC * span * cs       # tap slices + im2col concat
                  + C_out * KC * cs          # broadcast weights
                  + 2 * C_out * span * 4     # f32 acc (+ squared temp)
                  + 2 * C_out * span * yb)   # y block, double-buffered
    per_sample = max(per_sample, 2 * C_out * span * (yb + 4))   # BN pass blocks
    Nb = _pick_samples_per_block(N, block_budget // max(per_sample, 1))
    G = N // Nb

    cparams = pltpu.CompilerParams(dimension_semantics=("parallel",),
                                   vmem_limit_bytes=int(vmem_limit))

    conv_kernel = functools.partial(
        _conv_stats_kernel, K=Kk, dil_lanes=dil_lanes, pad_lanes=pad_lanes,
        span=span, fuse_taps=fuse_taps, cdt=cdt)

    y, stats = pl.pallas_call(
        conv_kernel,
        grid=(G,),
        in_specs=[
            pl.BlockSpec((Nb, C_tap, TVl), lambda g: (g, 0, 0)),
            pl.BlockSpec((C_out, KC), lambda g: (0, 0)),
        ],
        out_specs=[
            pl.BlockSpec((Nb, C_out, span), lambda g: (g, 0, 0)),
            pl.BlockSpec((1, C_out, 2), lambda g: (g, 0, 0)),
        ],
        out_shape=[
            jax.ShapeDtypeStruct((N, C_out, span), y_dt),
            jax.ShapeDtypeStruct((G, C_out, 2), jnp.float32),
        ],
        compiler_params=cparams,
    )(x_in, w_flat)

    # BatchNorm2d (training mode): batch mean / biased variance per channel.
    count = float(N * span)
    s = stats[:, :, 0].sum(axis=0)
    ssq = stats[:, :, 1].sum(axis=0)
    mean = s / count
    var = jnp.maximum(ssq / count - mean * mean, 0.0)   # guard cancellation
    # TODO(synk): channels with |mean| >> std would want a shifted / Welford
    # accumulation instead of E[x^2] - E[x]^2.
    inv_std = jax.lax.rsqrt(var + eps)
    scale = gamma.astype(jnp.float32) * inv_std
    shift = beta.astype(jnp.float32) - mean * scale
    scale_shift = jnp.stack([scale, shift], axis=-1)    # single (C_out, 2) operand

    out = pl.pallas_call(
        _bn_apply_kernel,
        grid=(G,),
        in_specs=[
            pl.BlockSpec((Nb, C_out, span), lambda g: (g, 0, 0)),
            pl.BlockSpec((C_out, 2), lambda g: (0, 0)),
        ],
        out_specs=pl.BlockSpec((Nb, C_out, span), lambda g: (g, 0, 0)),
        out_shape=jax.ShapeDtypeStruct((N, C_out, span), jnp.float32),
        compiler_params=cparams,
    )(y, scale_shift)

    return out.reshape(N, C_out, T_out, V)


def temporal_conv_reference(x, weight, bias, gamma, beta,
                            kernel_size, stride=1, dilation=1, eps=1e-5):
    """Pure-JAX f32 reference reproducing the PyTorch forward (training-mode BN)."""
    K = kernel_size
    pad = (K + (K - 1) * (dilation - 1) - 1) // 2
    w4 = weight[..., None]                            # (C_out, C_in, K, 1)
    y = jax.lax.conv_general_dilated(
        x, w4, window_strides=(stride, 1),
        padding=((pad, pad), (0, 0)),
        rhs_dilation=(dilation, 1),
        dimension_numbers=("NCHW", "OIHW", "NCHW"))
    y = y + bias[None, :, None, None]
    mean = y.mean(axis=(0, 2, 3))
    var = y.var(axis=(0, 2, 3))                       # biased variance
    y = (y - mean[None, :, None, None]) / jnp.sqrt(var + eps)[None, :, None, None]
    return y * gamma[None, :, None, None] + beta[None, :, None, None]


if __name__ == "__main__":
    # Small shapes consistent with the module: x is (N, C_in, T, V).
    N, C_in, C_out, T, V, K = 2, 4, 8, 16, 16, 3
    stride, dilation = 1, 1

    key = jax.random.PRNGKey(0)
    kx, kw, kb = jax.random.split(key, 3)
    x = jax.random.normal(kx, (N, C_in, T, V), dtype=jnp.float32)
    weight = 0.1 * jax.random.normal(kw, (C_out, C_in, K), dtype=jnp.float32)
    bias = 0.1 * jax.random.normal(kb, (C_out,), dtype=jnp.float32)
    gamma = jnp.ones((C_out,), dtype=jnp.float32)     # BatchNorm2d default init
    beta = jnp.zeros((C_out,), dtype=jnp.float32)

    ref = temporal_conv_reference(x, weight, bias, gamma, beta,
                                  kernel_size=K, stride=stride, dilation=dilation)

    # Strict check: f32 compute path matches the f32 reference tightly.
    fwd_f32 = jax.jit(functools.partial(
        temporal_conv_forward, kernel_size=K, stride=stride, dilation=dilation,
        compute_dtype=jnp.float32))
    out_f32 = jax.block_until_ready(fwd_f32(x, weight, bias, gamma, beta))
    assert out_f32.shape == ref.shape
    assert jnp.allclose(out_f32, ref, atol=1e-4, rtol=1e-4), "f32 mismatch vs reference"

    # Default fast path: bf16 MXU feed, f32 accumulation, bf16 intermediate y.
    fwd_bf16 = jax.jit(functools.partial(
        temporal_conv_forward, kernel_size=K, stride=stride, dilation=dilation,
        compute_dtype=jnp.bfloat16))
    out_bf16 = jax.block_until_ready(fwd_bf16(x, weight, bias, gamma, beta))
    assert out_bf16.shape == ref.shape
    assert jnp.allclose(out_bf16, ref, atol=5e-2, rtol=5e-2), "bf16 mismatch vs reference"

    print("KERNEL_OK")
</pallas_src>

<mosaic_0001>
module attributes {stable_mosaic.version = 11 : i64} {
  func.func @_conv_stats_kernel(%arg0: i32, %arg1: memref<1x4x256xf32, #tpu.memory_space<vmem>>, %arg2: memref<8x12xf32, #tpu.memory_space<vmem>>, %arg3: memref<1x8x256xf32, #tpu.memory_space<vmem>>, %arg4: memref<1x8x2xf32, #tpu.memory_space<vmem>>) attributes {dimension_semantics = [#tpu.dimension_semantics<parallel>], iteration_bounds = array<i64: 2>, scalar_prefetch = 0 : i64, scratch_operands = 0 : i64, tpu.core_type = #tpu.core_type<tc>, window_params = [{transform_indices = @transform_0, window_bounds = array<i64: 1, 4, 256>}, {pipeline_mode = #tpu.pipeline_mode<synchronous>, transform_indices = @transform_1, window_bounds = array<i64: 8, 12>}, {transform_indices = @transform_2, window_bounds = array<i64: 1, 8, 256>}, {transform_indices = @transform_3, window_bounds = array<i64: 1, 8, 2>}]} {
    %c0 = arith.constant 0 : index
    %c0_0 = arith.constant 0 : index
    %c0_1 = arith.constant 0 : index
    %0 = vector.load %arg1[%c0, %c0_0, %c0_1] : memref<1x4x256xf32, #tpu.memory_space<vmem>>, vector<1x4x256xf32>
    %c0_2 = arith.constant 0 : index
    %c0_3 = arith.constant 0 : index
    %1 = vector.load %arg2[%c0_2, %c0_3] : memref<8x12xf32, #tpu.memory_space<vmem>>, vector<8x12xf32>
    %2 = vector.extract_strided_slice %1 {offsets = [0, 0], sizes = [8, 4], strides = [1, 1]} : vector<8x12xf32> to vector<8x4xf32>
    %3 = vector.shape_cast %2 : vector<8x4xf32> to vector<1x8x4xf32>
    %cst = arith.constant 0.000000e+00 : f32
    %4 = vector.broadcast %cst : f32 to vector<1x4x16xf32>
    %5 = vector.extract_strided_slice %0 {offsets = [0, 0, 0], sizes = [1, 4, 240], strides = [1, 1, 1]} : vector<1x4x256xf32> to vector<1x4x240xf32>
    %6 = tpu.concatenate %4, %5 in 2 : vector<1x4x16xf32>, vector<1x4x240xf32> -> vector<1x4x256xf32>
    %cst_4 = arith.constant dense<0.000000e+00> : vector<1x8x256xf32>
    %7 = tpu.matmul %3, %6, %cst_4 {dimension_numbers = #tpu.dot_dimension_numbers<[2], [1], [1], [2], [0, 0, 0, 1, 1, 2], [0], [0]>} : vector<1x8x4xf32>, vector<1x4x256xf32>, vector<1x8x256xf32> -> vector<1x8x256xf32>
    %8 = vector.extract_strided_slice %1 {offsets = [0, 4], sizes = [8, 4], strides = [1, 1]} : vector<8x12xf32> to vector<8x4xf32>
    %9 = vector.shape_cast %8 : vector<8x4xf32> to vector<1x8x4xf32>
    %cst_5 = arith.constant dense<0.000000e+00> : vector<1x8x256xf32>
    %10 = tpu.matmul %9, %0, %cst_5 {dimension_numbers = #tpu.dot_dimension_numbers<[2], [1], [1], [2], [0, 0, 0, 1, 1, 2], [0], [0]>} : vector<1x8x4xf32>, vector<1x4x256xf32>, vector<1x8x256xf32> -> vector<1x8x256xf32>
    %11 = arith.addf %7, %10 : vector<1x8x256xf32>
    %12 = vector.extract_strided_slice %1 {offsets = [0, 8], sizes = [8, 4], strides = [1, 1]} : vector<8x12xf32> to vector<8x4xf32>
    %13 = vector.shape_cast %12 : vector<8x4xf32> to vector<1x8x4xf32>
    %14 = vector.extract_strided_slice %0 {offsets = [0, 0, 16], sizes = [1, 4, 240], strides = [1, 1, 1]} : vector<1x4x256xf32> to vector<1x4x240xf32>
    %cst_6 = arith.constant 0.000000e+00 : f32
    %15 = vector.broadcast %cst_6 : f32 to vector<1x4x16xf32>
    %16 = tpu.concatenate %14, %15 in 2 : vector<1x4x240xf32>, vector<1x4x16xf32> -> vector<1x4x256xf32>
    %cst_7 = arith.constant dense<0.000000e+00> : vector<1x8x256xf32>
    %17 = tpu.matmul %13, %16, %cst_7 {dimension_numbers = #tpu.dot_dimension_numbers<[2], [1], [1], [2], [0, 0, 0, 1, 1, 2], [0], [0]>} : vector<1x8x4xf32>, vector<1x4x256xf32>, vector<1x8x256xf32> -> vector<1x8x256xf32>
    %18 = arith.addf %11, %17 : vector<1x8x256xf32>
    %c0_8 = arith.constant 0 : index
    %c0_9 = arith.constant 0 : index
    %c0_10 = arith.constant 0 : index
    %19 = vector.load %arg3[%c0_8, %c0_9, %c0_10] : memref<1x8x256xf32, #tpu.memory_space<vmem>>, vector<1x8x256xf32>
    tpu.vector_store %arg3[%c0_8, %c0_9, %c0_10], %18 {strides = array<i32>} : memref<1x8x256xf32, #tpu.memory_space<vmem>>, vector<1x8x256xf32>,
    %cst_11 = arith.constant dense<0.000000e+00> : vector<8x256xf32>
    %20 = vector.multi_reduction <add>, %18, %cst_11 [0] : vector<1x8x256xf32> to vector<8x256xf32>
    %21 = arith.mulf %18, %18 : vector<1x8x256xf32>
    %cst_12 = arith.constant dense<0.000000e+00> : vector<8x256xf32>
    %22 = vector.multi_reduction <add>, %21, %cst_12 [0] : vector<1x8x256xf32> to vector<8x256xf32>
    %cst_13 = arith.constant dense<0.000000e+00> : vector<8xf32>
    %23 = vector.multi_reduction <add>, %20, %cst_13 [1] : vector<8x256xf32> to vector<8xf32>
    %24 = vector.shape_cast %23 : vector<8xf32> to vector<8x1xf32>
    %cst_14 = arith.constant dense<0.000000e+00> : vector<8xf32>
    %25 = vector.multi_reduction <add>, %22, %cst_14 [1] : vector<8x256xf32> to vector<8xf32>
    %26 = vector.shape_cast %25 : vector<8xf32> to vector<8x1xf32>
    %27 = tpu.concatenate %24, %26 in 1 : vector<8x1xf32>, vector<8x1xf32> -> vector<8x2xf32>
    %28 = vector.shape_cast %27 : vector<8x2xf32> to vector<1x8x2xf32>
    %c0_15 = arith.constant 0 : index
    %c0_16 = arith.constant 0 : index
    %c0_17 = arith.constant 0 : index
    %29 = vector.load %arg4[%c0_15, %c0_16, %c0_17] : memref<1x8x2xf32, #tpu.memory_space<vmem>>, vector<1x8x2xf32>
    tpu.vector_store %arg4[%c0_15, %c0_16, %c0_17], %28 {strides = array<i32>} : memref<1x8x2xf32, #tpu.memory_space<vmem>>, vector<1x8x2xf32>,
    return
  }
  func.func @transform_0(%arg0: i32) -> (i32, i32, i32) {
    %c0_i32 = arith.constant 0 : i32
    %c0_i32_0 = arith.constant 0 : i32
    %c0_i32_1 = arith.constant 0 : i32
    return %arg0, %c0_i32, %c0_i32_0 : i32, i32, i32
  }
  func.func @transform_1(%arg0: i32) -> (i32, i32) {
    %c0_i32 = arith.constant 0 : i32
    %c0_i32_0 = arith.constant 0 : i32
    %c0_i32_1 = arith.constant 0 : i32
    return %c0_i32, %c0_i32_0 : i32, i32
  }
  func.func @transform_2(%arg0: i32) -> (i32, i32, i32) {
    %c0_i32 = arith.constant 0 : i32
    %c0_i32_0 = arith.constant 0 : i32
    %c0_i32_1 = arith.constant 0 : i32
    return %arg0, %c0_i32, %c0_i32_0 : i32, i32, i32
  }
  func.func @transform_3(%arg0: i32) -> (i32, i32, i32) {
    %c0_i32 = arith.constant 0 : i32
    %c0_i32_0 = arith.constant 0 : i32
    %c0_i32_1 = arith.constant 0 : i32
    return %arg0, %c0_i32, %c0_i32_0 : i32, i32, i32
  }
}

module attributes {stable_mosaic.version = 11 : i64} {
  func.func @_bn_apply_kernel(%arg0: i32, %arg1: memref<1x8x256xf32, #tpu.memory_space<vmem>>, %arg2: memref<8x2xf32, #tpu.memory_space<vmem>>, %arg3: memref<1x8x256xf32, #tpu.memory_space<vmem>>) attributes {dimension_semantics = [#tpu.dimension_semantics<parallel>], iteration_bounds = array<i64: 2>, scalar_prefetch = 0 : i64, scratch_operands = 0 : i64, tpu.core_type = #tpu.core_type<tc>, window_params = [{transform_indices = @transform_0, window_bounds = array<i64: 1, 8, 256>}, {pipeline_mode = #tpu.pipeline_mode<synchronous>, transform_indices = @transform_1, window_bounds = array<i64: 8, 2>}, {transform_indices = @transform_2, window_bounds = array<i64: 1, 8, 256>}]} {
    %c0 = arith.constant 0 : index
    %c0_0 = arith.constant 0 : index
    %0 = vector.load %arg2[%c0, %c0_0] : memref<8x2xf32, #tpu.memory_space<vmem>>, vector<8x2xf32>
    %1 = vector.extract_strided_slice %0 {offsets = [0, 0], sizes = [8, 1], strides = [1, 1]} : vector<8x2xf32> to vector<8x1xf32>
    %2 = vector.shape_cast %1 : vector<8x1xf32> to vector<1x8x1xf32>
    %3 = vector.extract_strided_slice %0 {offsets = [0, 1], sizes = [8, 1], strides = [1, 1]} : vector<8x2xf32> to vector<8x1xf32>
    %4 = vector.shape_cast %3 : vector<8x1xf32> to vector<1x8x1xf32>
    %c0_1 = arith.constant 0 : index
    %c0_2 = arith.constant 0 : index
    %c0_3 = arith.constant 0 : index
    %5 = vector.load %arg1[%c0_1, %c0_2, %c0_3] : memref<1x8x256xf32, #tpu.memory_space<vmem>>, vector<1x8x256xf32>
    %6 = vector.broadcast %2 : vector<1x8x1xf32> to vector<1x8x256xf32>
    %7 = arith.mulf %5, %6 : vector<1x8x256xf32>
    %8 = vector.broadcast %4 : vector<1x8x1xf32> to vector<1x8x256xf32>
    %9 = arith.addf %7, %8 : vector<1x8x256xf32>
    %c0_4 = arith.constant 0 : index
    %c0_5 = arith.constant 0 : index
    %c0_6 = arith.constant 0 : index
    %10 = vector.load %arg3[%c0_4, %c0_5, %c0_6] : memref<1x8x256xf32, #tpu.memory_space<vmem>>, vector<1x8x256xf32>
    tpu.vector_store %arg3[%c0_4, %c0_5, %c0_6], %9 {strides = array<i32>} : memref<1x8x256xf32, #tpu.memory_space<vmem>>, vector<1x8x256xf32>,
    return
  }
  func.func @transform_0(%arg0: i32) -> (i32, i32, i32) {
    %c0_i32 = arith.constant 0 : i32
    %c0_i32_0 = arith.constant 0 : i32
    %c0_i32_1 = arith.constant 0 : i32
    return %arg0, %c0_i32, %c0_i32_0 : i32, i32, i32
  }
  func.func @transform_1(%arg0: i32) -> (i32, i32) {
    %c0_i32 = arith.constant 0 : i32
    %c0_i32_0 = arith.constant 0 : i32
    %c0_i32_1 = arith.constant 0 : i32
    return %c0_i32, %c0_i32_0 : i32, i32
  }
  func.func @transform_2(%arg0: i32) -> (i32, i32, i32) {
    %c0_i32 = arith.constant 0 : i32
    %c0_i32_0 = arith.constant 0 : i32
    %c0_i32_1 = arith.constant 0 : i32
    return %arg0, %c0_i32, %c0_i32_0 : i32, i32, i32
  }
}

</mosaic_0001>

<llo_original>
// kernel: temporal_conv_forward.3
$region0: #{temporal_conv_forward.3}
  #allocation0 [shape = 'u32[]', space=smem, size = 0x4, offset = 0x4, fixed_abs, tag = 'smem constant byte address 0x4 - core index']
  #allocation1 [shape = 'u32[72,128]{1,0:T(1,128)}', space=vmem, size = 0x9000, scoped, tag = 'internal scratch']
  %s0 = inlined_call_operand.vmem [shape: f32[2,8,256], index: 0, kind: input, shape index: {}]
  %s1 = inlined_call_operand.vmem [shape: f32[8,2], index: 1, kind: input, shape index: {}]
  %s2 = inlined_call_operand.vmem [shape: f32[2,8,256], index: 2, kind: output, shape index: {}]
  %s3 = sld [smem:[#allocation0]]
  $region41: #{temporal_conv_forward.3} parent=0
    _
  %s5 = ssub.s32 1, %s3
  %s6 = scalar_select 0, %s5, %s3
  loop: start=0, step=1, limit=4
  $region2: #{temporal_conv_forward.3} parent=0 // loop_pre_header
    _
  $region3: #{temporal_conv_forward.3} parent=0 // loop_header
    %s8 = sphi 0, %s12
    %p9 = scmp.ge.s32.totalorder %s8, 4
    %s18 = sphi 0, %s20
    %s21 = sphi 0, %s18
    %s22 = sphi 0, %s21
    %s38 = sphi 0, %s22
    %s42 = sphi 0, %s42
    %s44 = sphi 0, %s42
    %s45 = sphi 0, %s44
    %s59 = sphi 0, %s45
    %s65 = sphi 0, %s67
    %s68 = sphi 0, %s65
    %s69 = sphi 0, %s68
    %s85 = sphi 0, %s69
  $region4: #{temporal_conv_forward.3} parent=0 // loop_header_branch
    %11 = sbr.rel (%p9) target = $region8
  $region5: #{temporal_conv_forward.3} parent=0 // loop_body
    %s13 = ssub.s32 %s8, 1
    %s14 = ssub.s32 %s8, 2
    %s15 = sadd.s32 %s8, 1
    %s16 = ssub.s32 %s8, %s15
    %p17 = scmp.eq.s32.totalorder %s16, 0
    %s19 = sadd.s32 %s18, 1
    %s20 = scalar_select %p17, %s18, %s19
    %p23 = pneg %p17
    %p24 = scmp.eq.s32.totalorder %s8, 1
    %p25 = por %p23, %p24
    %p26 = scmp.ne.s32.totalorder %s18, %s21
    %p27 = scmp.eq.s32.totalorder %s8, 0
    %p28 = por %p26, %p27
    %p29 = scmp.ne.s32.totalorder %s18, %s21
    %p30 = scmp.eq.s32.totalorder %s13, 1
    %p31 = por %p29, %p30
    %p32 = scmp.ne.s32.totalorder %s21, %s22
    %p33 = scmp.eq.s32.totalorder %s13, 0
    %p34 = por %p32, %p33
    %p35 = scmp.ne.s32.totalorder %s21, %s22
    %p36 = scmp.eq.s32.totalorder %s14, 1
    %p37 = por %p35, %p36
    %p39 = scmp.ne.s32.totalorder %s22, %s38
    %p40 = scmp.eq.s32.totalorder %s14, 0
    %p41 = por %p39, %p40
    %s43 = sadd.s32 %s42, 1
    %p46 = scmp.eq.s32.totalorder %s8, 1
    %p47 = scmp.ne.s32.totalorder %s42, %s44
    %p48 = scmp.eq.s32.totalorder %s8, 0
    %p49 = por %p47, %p48
    %p50 = scmp.ne.s32.totalorder %s42, %s44
    %p51 = scmp.eq.s32.totalorder %s13, 1
    %p52 = por %p50, %p51
    %p53 = scmp.ne.s32.totalorder %s44, %s45
    %p54 = scmp.eq.s32.totalorder %s13, 0
    %p55 = por %p53, %p54
    %p56 = scmp.ne.s32.totalorder %s44, %s45
    %p57 = scmp.eq.s32.totalorder %s14, 1
    %p58 = por %p56, %p57
    %p60 = scmp.ne.s32.totalorder %s45, %s59
    %p61 = scmp.eq.s32.totalorder %s14, 0
    %p62 = por %p60, %p61
    %s63 = ssub.s32 %s8, %s15
    %p64 = scmp.eq.s32.totalorder %s63, 0
    %s66 = sadd.s32 %s65, 1
    %s67 = scalar_select %p64, %s65, %s66
    %p70 = pneg %p64
    %p71 = scmp.eq.s32.totalorder %s8, 1
    %p72 = por %p70, %p71
    %p73 = scmp.ne.s32.totalorder %s65, %s68
    %p74 = scmp.eq.s32.totalorder %s8, 0
    %p75 = por %p73, %p74
    %p76 = scmp.ne.s32.totalorder %s65, %s68
    %p77 = scmp.eq.s32.totalorder %s13, 1
    %p78 = por %p76, %p77
    %p79 = scmp.ne.s32.totalorder %s68, %s69
    %p80 = scmp.eq.s32.totalorder %s13, 0
    %p81 = por %p79, %p80
    %p82 = scmp.ne.s32.totalorder %s68, %s69
    %p83 = scmp.eq.s32.totalorder %s14, 1
    %p84 = por %p82, %p83
    %p86 = scmp.ne.s32.totalorder %s69, %s85
    %p87 = scmp.eq.s32.totalorder %s14, 0
    %p88 = por %p86, %p87
    %p89 = scmp.le.s32.totalorder 1, %s8
    %p90 = scmp.lt.s32.totalorder %s8, 3
    %p91 = pnand %p89, %p90
    %p92 = pneg %p91
    // Predicated region
    $region9: #{temporal_conv_forward.3} parent=5 // pred_check
      _
    $region10: #{temporal_conv_forward.3} parent=5 // pred_check_branch
      %94 = sbr.rel (%p91) target = $region12
    $region11: #{temporal_conv_forward.3} parent=5 // pred_region
      %s95 = ssub.s32 %s8, 1
      // Predicated region
      $region13: #{temporal_conv_forward.3} parent=11 // pred_check
        %p96 = pneg %p55
      $region14: #{temporal_conv_forward.3} parent=11 // pred_check_branch
        %98 = sbr.rel (%p96) target = $region16
      $region15: #{temporal_conv_forward.3} parent=11 // pred_region
        _
      $region16: #{temporal_conv_forward.3} parent=11 // pred_fallthru
        _
    $region12: #{temporal_conv_forward.3} parent=5 // pred_fallthru
      _
    %p99 = scmp.lt.s32.totalorder %s8, 2
    // Predicated region
    $region17: #{temporal_conv_forward.3} parent=5 // pred_check
      %p100 = pneg %p99
    $region18: #{temporal_conv_forward.3} parent=5 // pred_check_branch
      %102 = sbr.rel (%p100) target = $region20
    $region19: #{temporal_conv_forward.3} parent=5 // pred_region
      // Predicated region
      $region21: #{temporal_conv_forward.3} parent=19 // pred_check
        %p103 = pneg %p28
      $region22: #{temporal_conv_forward.3} parent=19 // pred_check_branch
        %105 = sbr.rel (%p103) target = $region24
      $region23: #{temporal_conv_forward.3} parent=19 // pred_region
        %p106 = scmp.lt.s32.totalorder %s8, 1
        %s107 = scalar_select %p106, %s8, 1
        %s108 = smul.addr %s107, 2
        %s109 = smul.addr %s108, 8
        %s110 = scalar_lea.vmem %s0, %s109
      $region24: #{temporal_conv_forward.3} parent=19 // pred_fallthru
        _
    $region20: #{temporal_conv_forward.3} parent=5 // pred_fallthru
      _
    %p111 = scmp.le.s32.totalorder 1, %s8
    %p112 = scmp.lt.s32.totalorder %s8, 3
    %p113 = pnand %p111, %p112
    %p114 = pneg %p113
    // Predicated region
    $region25: #{temporal_conv_forward.3} parent=5 // pred_check
      _
    $region26: #{temporal_conv_forward.3} parent=5 // pred_check_branch
      %116 = sbr.rel (%p113) target = $region28
    $region27: #{temporal_conv_forward.3} parent=5 // pred_region
      %s117 = ssub.s32 %s8, 1
      %p118 = scmp.lt.s32.totalorder %s13, 1
      %s119 = scalar_select %p118, %s13, 1
      %s120 = smul.addr %s119, 2
      %s121 = smul.addr %s120, 8
      %s122 = scalar_lea.vmem %s0, %s121
      %p123 = pneg %p34
      %p124 = pneg %p31
      %p125 = pneg %p55
      %p126 = pneg %p52
      %p127 = pneg %p81
      %p128 = pneg %p78
      %p129 = scmp.lt.s32.totalorder %s13, 1
      %s130 = scalar_select %p129, %s13, 1
      %s131 = smul.addr %s130, 2
      %s132 = smul.addr %s131, 8
      %s133 = scalar_lea.vmem %s2, %s132
      %p134 = scmp.lt.s32.totalorder %s13, 1
      %s135 = scalar_select %p134, %s13, 1
      %s136 = smul.addr %s135, 2
      %s137 = smul.addr %s136, 8
      %s138 = scalar_lea.vmem %s0, %s137
      %p139 = scmp.lt.s32.totalorder %s13, 1
      %s140 = scalar_select %p139, %s13, 1
      %s141 = smul.addr %s140, 2
      %s142 = smul.addr %s141, 8
      %s143 = scalar_lea.vmem %s2, %s142
      %v144 = vld [vmem:[%s1] sm:$0xff]
      %v145 = vld [vmem:[%s138] sm:$0xff]
      %v146 = vld [vmem:[%s138 + $0x8] sm:$0xff]
      %148 = vset.pattern.permute.xlu0 0
      %149 = vperm.xlu0 %148, %v144
      %v150 = vpop.permute.xlu0 %149
      %v152 = vmul.f32 %v145, %v150
      %v153 = vmul.f32 %v146, %v150
      %154 = vset.pattern.permute.xlu0 1
      %155 = vperm.xlu0 %154, %v144
      %v156 = vpop.permute.xlu0 %155
      %v158 = vadd.f32 %v152, %v156
      %v159 = vadd.f32 %v153, %v156
      %160 = vst [vmem:[%s143] sm:$0xff] %v158
      %161 = vst [vmem:[%s143 + $0x8] sm:$0xff] %v159
      %p162 = scmp.lt.s32.totalorder %s13, 1
      %s163 = scalar_select %p162, %s13, 1
      %s164 = smul.addr %s163, 2
      %s165 = smul.addr %s164, 8
      %s166 = scalar_lea.vmem %s2, %s165
      // Predicated region
      $region29: #{temporal_conv_forward.3} parent=27 // pred_check
        %p167 = pneg %p78
      $region30: #{temporal_conv_forward.3} parent=27 // pred_check_branch
        %169 = sbr.rel (%p167) target = $region32
      $region31: #{temporal_conv_forward.3} parent=27 // pred_region
        _
      $region32: #{temporal_conv_forward.3} parent=27 // pred_fallthru
        _
    $region28: #{temporal_conv_forward.3} parent=5 // pred_fallthru
      _
    %p170 = scmp.le.s32.totalorder 2, %s8
    // Predicated region
    $region33: #{temporal_conv_forward.3} parent=5 // pred_check
      %p171 = pneg %p170
    $region34: #{temporal_conv_forward.3} parent=5 // pred_check_branch
      %173 = sbr.rel (%p171) target = $region36
    $region35: #{temporal_conv_forward.3} parent=5 // pred_region
      %s174 = ssub.s32 %s8, 2
      // Predicated region
      $region37: #{temporal_conv_forward.3} parent=35 // pred_check
        %p175 = pneg %p84
      $region38: #{temporal_conv_forward.3} parent=35 // pred_check_branch
        %177 = sbr.rel (%p175) target = $region40
      $region39: #{temporal_conv_forward.3} parent=35 // pred_region
        %p178 = scmp.lt.s32.totalorder %s14, 1
        %s179 = scalar_select %p178, %s14, 1
        %s180 = smul.addr %s179, 2
        %s181 = smul.addr %s180, 8
        %s182 = scalar_lea.vmem %s2, %s181
      $region40: #{temporal_conv_forward.3} parent=35 // pred_fallthru
        _
    $region36: #{temporal_conv_forward.3} parent=5 // pred_fallthru
      _
  $region6: #{temporal_conv_forward.3} parent=0 // loop_footer
    %s12 = sadd.s32 1, %s8
  $region7: #{temporal_conv_forward.3} parent=0 // loop_footer_branch
    %7 = sbr.rel target = $region3
  $region8: #{temporal_conv_forward.3} parent=0 // loop_exit
    _

// kernel: temporal_conv_forward.2
$region0: #{temporal_conv_forward.2}
  #allocation0 [shape = 'u32[]', space=smem, size = 0x4, offset = 0x4, fixed_abs, tag = 'smem constant byte address 0x4 - core index']
  #allocation1 [shape = 'u32[72,128]{1,0:T(1,128)}', space=vmem, size = 0x9000, scoped, tag = 'internal scratch']
  %s0 = inlined_call_operand.vmem [shape: f32[2,4,256], index: 0, kind: input, shape index: {}]
  %s1 = inlined_call_operand.vmem [shape: f32[8,12], index: 1, kind: input, shape index: {}]
  %s2 = inlined_call_operand.vmem [shape: f32[2,8,256], index: 2, kind: output, shape index: {0}]
  %s3 = inlined_call_operand.vmem [shape: f32[2,8,2], index: 3, kind: output, shape index: {1}]
  %4 = xla_tuple %s2, %s3
  %s5 = sld [smem:[#allocation0]]
  $region49: #{temporal_conv_forward.2} parent=0
    _
  %s7 = ssub.s32 1, %s5
  %s8 = scalar_select 0, %s7, %s5
  loop: start=0, step=1, limit=4
  $region2: #{temporal_conv_forward.2} parent=0 // loop_pre_header
    _
  $region3: #{temporal_conv_forward.2} parent=0 // loop_header
    %s10 = sphi 0, %s14
    %p11 = scmp.ge.s32.totalorder %s10, 4
    %s20 = sphi 0, %s22
    %s23 = sphi 0, %s20
    %s24 = sphi 0, %s23
    %s40 = sphi 0, %s24
    %s44 = sphi 0, %s44
    %s46 = sphi 0, %s44
    %s47 = sphi 0, %s46
    %s61 = sphi 0, %s47
    %s67 = sphi 0, %s69
    %s70 = sphi 0, %s67
    %s71 = sphi 0, %s70
    %s87 = sphi 0, %s71
    %s93 = sphi 0, %s95
    %s96 = sphi 0, %s93
    %s97 = sphi 0, %s96
    %s113 = sphi 0, %s97
  $region4: #{temporal_conv_forward.2} parent=0 // loop_header_branch
    %13 = sbr.rel (%p11) target = $region8
  $region5: #{temporal_conv_forward.2} parent=0 // loop_body
    %s15 = ssub.s32 %s10, 1
    %s16 = ssub.s32 %s10, 2
    %s17 = sadd.s32 %s10, 1
    %s18 = ssub.s32 %s10, %s17
    %p19 = scmp.eq.s32.totalorder %s18, 0
    %s21 = sadd.s32 %s20, 1
    %s22 = scalar_select %p19, %s20, %s21
    %p25 = pneg %p19
    %p26 = scmp.eq.s32.totalorder %s10, 1
    %p27 = por %p25, %p26
    %p28 = scmp.ne.s32.totalorder %s20, %s23
    %p29 = scmp.eq.s32.totalorder %s10, 0
    %p30 = por %p28, %p29
    %p31 = scmp.ne.s32.totalorder %s20, %s23
    %p32 = scmp.eq.s32.totalorder %s15, 1
    %p33 = por %p31, %p32
    %p34 = scmp.ne.s32.totalorder %s23, %s24
    %p35 = scmp.eq.s32.totalorder %s15, 0
    %p36 = por %p34, %p35
    %p37 = scmp.ne.s32.totalorder %s23, %s24
    %p38 = scmp.eq.s32.totalorder %s16, 1
    %p39 = por %p37, %p38
    %p41 = scmp.ne.s32.totalorder %s24, %s40
    %p42 = scmp.eq.s32.totalorder %s16, 0
    %p43 = por %p41, %p42
    %s45 = sadd.s32 %s44, 1
    %p48 = scmp.eq.s32.totalorder %s10, 1
    %p49 = scmp.ne.s32.totalorder %s44, %s46
    %p50 = scmp.eq.s32.totalorder %s10, 0
    %p51 = por %p49, %p50
    %p52 = scmp.ne.s32.totalorder %s44, %s46
    %p53 = scmp.eq.s32.totalorder %s15, 1
    %p54 = por %p52, %p53
    %p55 = scmp.ne.s32.totalorder %s46, %s47
    %p56 = scmp.eq.s32.totalorder %s15, 0
    %p57 = por %p55, %p56
    %p58 = scmp.ne.s32.totalorder %s46, %s47
    %p59 = scmp.eq.s32.totalorder %s16, 1
    %p60 = por %p58, %p59
    %p62 = scmp.ne.s32.totalorder %s47, %s61
    %p63 = scmp.eq.s32.totalorder %s16, 0
    %p64 = por %p62, %p63
    %s65 = ssub.s32 %s10, %s17
    %p66 = scmp.eq.s32.totalorder %s65, 0
    %s68 = sadd.s32 %s67, 1
    %s69 = scalar_select %p66, %s67, %s68
    %p72 = pneg %p66
    %p73 = scmp.eq.s32.totalorder %s10, 1
    %p74 = por %p72, %p73
    %p75 = scmp.ne.s32.totalorder %s67, %s70
    %p76 = scmp.eq.s32.totalorder %s10, 0
    %p77 = por %p75, %p76
    %p78 = scmp.ne.s32.totalorder %s67, %s70
    %p79 = scmp.eq.s32.totalorder %s15, 1
    %p80 = por %p78, %p79
    %p81 = scmp.ne.s32.totalorder %s70, %s71
    %p82 = scmp.eq.s32.totalorder %s15, 0
    %p83 = por %p81, %p82
    %p84 = scmp.ne.s32.totalorder %s70, %s71
    %p85 = scmp.eq.s32.totalorder %s16, 1
    %p86 = por %p84, %p85
    %p88 = scmp.ne.s32.totalorder %s71, %s87
    %p89 = scmp.eq.s32.totalorder %s16, 0
    %p90 = por %p88, %p89
    %s91 = ssub.s32 %s10, %s17
    %p92 = scmp.eq.s32.totalorder %s91, 0
    %s94 = sadd.s32 %s93, 1
    %s95 = scalar_select %p92, %s93, %s94
    %p98 = pneg %p92
    %p99 = scmp.eq.s32.totalorder %s10, 1
    %p100 = por %p98, %p99
    %p101 = scmp.ne.s32.totalorder %s93, %s96
    %p102 = scmp.eq.s32.totalorder %s10, 0
    %p103 = por %p101, %p102
    %p104 = scmp.ne.s32.totalorder %s93, %s96
    %p105 = scmp.eq.s32.totalorder %s15, 1
    %p106 = por %p104, %p105
    %p107 = scmp.ne.s32.totalorder %s96, %s97
    %p108 = scmp.eq.s32.totalorder %s15, 0
    %p109 = por %p107, %p108
    %p110 = scmp.ne.s32.totalorder %s96, %s97
    %p111 = scmp.eq.s32.totalorder %s16, 1
    %p112 = por %p110, %p111
    %p114 = scmp.ne.s32.totalorder %s97, %s113
    %p115 = scmp.eq.s32.totalorder %s16, 0
    %p116 = por %p114, %p115
    %p117 = scmp.le.s32.totalorder 1, %s10
    %p118 = scmp.lt.s32.totalorder %s10, 3
    %p119 = pnand %p117, %p118
    %p120 = pneg %p119
    // Predicated region
    $region9: #{temporal_conv_forward.2} parent=5 // pred_check
      _
    $region10: #{temporal_conv_forward.2} parent=5 // pred_check_branch
      %122 = sbr.rel (%p119) target = $region12
    $region11: #{temporal_conv_forward.2} parent=5 // pred_region
      %s123 = ssub.s32 %s10, 1
      // Predicated region
      $region13: #{temporal_conv_forward.2} parent=11 // pred_check
        %p124 = pneg %p57
      $region14: #{temporal_conv_forward.2} parent=11 // pred_check_branch
        %126 = sbr.rel (%p124) target = $region16
      $region15: #{temporal_conv_forward.2} parent=11 // pred_region
        _
      $region16: #{temporal_conv_forward.2} parent=11 // pred_fallthru
        _
    $region12: #{temporal_conv_forward.2} parent=5 // pred_fallthru
      _
    %p127 = scmp.lt.s32.totalorder %s10, 2
    // Predicated region
    $region17: #{temporal_conv_forward.2} parent=5 // pred_check
      %p128 = pneg %p127
    $region18: #{temporal_conv_forward.2} parent=5 // pred_check_branch
      %130 = sbr.rel (%p128) target = $region20
    $region19: #{temporal_conv_forward.2} parent=5 // pred_region
      // Predicated region
      $region21: #{temporal_conv_forward.2} parent=19 // pred_check
        %p131 = pneg %p30
      $region22: #{temporal_conv_forward.2} parent=19 // pred_check_branch
        %133 = sbr.rel (%p131) target = $region24
      $region23: #{temporal_conv_forward.2} parent=19 // pred_region
        %p134 = scmp.lt.s32.totalorder %s10, 1
        %s135 = scalar_select %p134, %s10, 1
        %s136 = smul.addr %s135, 2
        %s137 = smul.addr %s136, 4
        %s138 = scalar_lea.vmem %s0, %s137
      $region24: #{temporal_conv_forward.2} parent=19 // pred_fallthru
        _
    $region20: #{temporal_conv_forward.2} parent=5 // pred_fallthru
      _
    %p139 = scmp.le.s32.totalorder 1, %s10
    %p140 = scmp.lt.s32.totalorder %s10, 3
    %p141 = pnand %p139, %p140
    %p142 = pneg %p141
    // Predicated region
    $region25: #{temporal_conv_forward.2} parent=5 // pred_check
      _
    $region26: #{temporal_conv_forward.2} parent=5 // pred_check_branch
      %144 = sbr.rel (%p141) target = $region28
    $region27: #{temporal_conv_forward.2} parent=5 // pred_region
      %s145 = ssub.s32 %s10, 1
      %p146 = scmp.lt.s32.totalorder %s15, 1
      %s147 = scalar_select %p146, %s15, 1
      %s148 = smul.addr %s147, 2
      %s149 = smul.addr %s148, 4
      %s150 = scalar_lea.vmem %s0, %s149
      %p151 = pneg %p36
      %p152 = pneg %p33
      %p153 = pneg %p57
      %p154 = pneg %p54
      %p155 = pneg %p83
      %p156 = pneg %p80
      %p157 = scmp.lt.s32.totalorder %s15, 1
      %s158 = scalar_select %p157, %s15, 1
      %s159 = smul.addr %s158, 2
      %s160 = smul.addr %s159, 8
      %s161 = scalar_lea.vmem %s2, %s160
      %p162 = pneg %p109
      %p163 = pneg %p106
      %p164 = scmp.lt.s32.totalorder %s15, 1
      %s165 = scalar_select %p164, %s15, 1
      %s166 = smul.addr %s165, 8
      %s167 = scalar_lea.vmem %s3, %s166
      %p168 = scmp.lt.s32.totalorder %s15, 1
      %s169 = scalar_select %p168, %s15, 1
      %s170 = smul.addr %s169, 2
      %s171 = smul.addr %s170, 4
      %s172 = scalar_lea.vmem %s0, %s171
      %p173 = scmp.lt.s32.totalorder %s15, 1
      %s174 = scalar_select %p173, %s15, 1
      %s175 = smul.addr %s174, 2
      %s176 = smul.addr %s175, 8
      %s177 = scalar_lea.vmem %s2, %s176
      %p178 = scmp.lt.s32.totalorder %s15, 1
      %s179 = scalar_select %p178, %s15, 1
      %s180 = smul.addr %s179, 8
      %s181 = scalar_lea.vmem %s3, %s180
      %v182 = vld [vmem:[%s172] sm:$0xff]
      %v183 = vld [vmem:[%s1] sm:$0xff]
      %185 = vst [vmem:[#allocation1] ss:$2 sm:$0xff] %v182
      %v186 = vld.sshfl [vmem:[#allocation1] sm:$0xff pattern:$0x75316420]
      %v187 = vld.sshfl [vmem:[#allocation1 + $0x8] sm:$0xff pattern:$0x75316420]
      %188 = vrot.lane.b32.xlu0 %v186, 16
      %v189 = vpop.permute.xlu0 %188
      %190 = vrot.lane.b32.xlu0 %v187, 16
      %v191 = vpop.permute.xlu0 %190
      %vm192 = vcmask 130048
      %v193 = vsel %vm192, %v189, %v191
      %v195 = vsel %vm192, 0.0, %v189
      %197 = vrot.lane.b32.xlu0 %v183, 124
      %v198 = vpop.permute.xlu0 %197
      %199 = vst [vmem:[#allocation1] ss:$2 sm:$0xff] %v182
      %v200 = vld.sshfl [vmem:[#allocation1] sm:$0xff pattern:$0x75316420]
      %v201 = vld.sshfl [vmem:[#allocation1 + $0x8] sm:$0xff pattern:$0x75316420]
      %vm202 = vcmask 31744
      %v203 = vsel %vm202, %v198, 0
      %vm205 = vcmask 1043456
      %v206 = vsel %vm205, %v200, 0
      %v208 = vsel %vm205, %v201, 0
      %210 = vmatpush.msra.mxu0 0.0
      %211 = vmatpush.msra.mxu0 0.0
      %212 = vmatpush.msra.mxu0 0.0
      %213 = vmatpush.msra.mxu0 0.0
      %214 = vmatpush.msra.mxu0 0.0
      %215 = vmatpush.msra.mxu0 0.0
      %216 = vmatpush.msra.mxu0 0.0
      %217 = vmatpush.msra.mxu0 0.0
      %218 = vmatpush.msra.mxu0 0.0
      %219 = vmatpush.msra.mxu0 0.0
      %220 = vmatpush.msra.mxu0 0.0
      %221 = vmatpush.msra.mxu0 0.0
      %222 = vmatpush.msra.mxu0 0.0
      %223 = vmatpush.msra.mxu0 0.0
      %224 = vmatpush.msra.mxu0 0.0
      %225 = vmatpush.msra.mxu0 %v206
      %226 = vmatmul.f32.gmra.mxu0 %v203
      %v227 = vpop.f32.mrf.mxu0
      %v228 = vadd.f32 0.0, %v227
      %229 = vdwg.mxu0
      %230 = vmatpush.msra.mxu0 0.0
      %231 = vmatpush.msra.mxu0 0.0
      %232 = vmatpush.msra.mxu0 0.0
      %233 = vmatpush.msra.mxu0 0.0
      %234 = vmatpush.msra.mxu0 0.0
      %235 = vmatpush.msra.mxu0 0.0
      %236 = vmatpush.msra.mxu0 0.0
      %237 = vmatpush.msra.mxu0 0.0
      %238 = vmatpush.msra.mxu0 0.0
      %239 = vmatpush.msra.mxu0 0.0
      %240 = vmatpush.msra.mxu0 0.0
      %241 = vmatpush.msra.mxu0 0.0
      %242 = vmatpush.msra.mxu0 0.0
      %243 = vmatpush.msra.mxu0 0.0
      %244 = vmatpush.msra.mxu0 0.0
      %245 = vmatpush.msra.mxu0 %v208
      %246 = vmatmul.f32.gmra.mxu0 %v203
      %v247 = vpop.f32.mrf.mxu0
      %v248 = vadd.f32 0.0, %v247
      %249 = vdwg.mxu0
      %v250 = vsel %vm202, %v183, 0
      %v253 = vsel %vm205, %v195, 0
      %v255 = vsel %vm205, %v193, 0
      %257 = vmatpush.msra.mxu0 0.0
      %258 = vmatpush.msra.mxu0 0.0
      %259 = vmatpush.msra.mxu0 0.0
      %260 = vmatpush.msra.mxu0 0.0
      %261 = vmatpush.msra.mxu0 0.0
      %262 = vmatpush.msra.mxu0 0.0
      %263 = vmatpush.msra.mxu0 0.0
      %264 = vmatpush.msra.mxu0 0.0
      %265 = vmatpush.msra.mxu0 0.0
      %266 = vmatpush.msra.mxu0 0.0
      %267 = vmatpush.msra.mxu0 0.0
      %268 = vmatpush.msra.mxu0 0.0
      %269 = vmatpush.msra.mxu0 0.0
      %270 = vmatpush.msra.mxu0 0.0
      %271 = vmatpush.msra.mxu0 0.0
      %272 = vmatpush.msra.mxu0 %v253
      %273 = vmatmul.f32.gmra.mxu0 %v250
      %v274 = vpop.f32.mrf.mxu0
      %v275 = vadd.f32 %v228, %v274
      %276 = vdwg.mxu0
      %277 = vmatpush.msra.mxu0 0.0
      %278 = vmatpush.msra.mxu0 0.0
      %279 = vmatpush.msra.mxu0 0.0
      %280 = vmatpush.msra.mxu0 0.0
      %281 = vmatpush.msra.mxu0 0.0
      %282 = vmatpush.msra.mxu0 0.0
      %283 = vmatpush.msra.mxu0 0.0
      %284 = vmatpush.msra.mxu0 0.0
      %285 = vmatpush.msra.mxu0 0.0
      %286 = vmatpush.msra.mxu0 0.0
      %287 = vmatpush.msra.mxu0 0.0
      %288 = vmatpush.msra.mxu0 0.0
      %289 = vmatpush.msra.mxu0 0.0
      %290 = vmatpush.msra.mxu0 0.0
      %291 = vmatpush.msra.mxu0 0.0
      %292 = vmatpush.msra.mxu0 %v255
      %293 = vmatmul.f32.gmra.mxu0 %v250
      %v294 = vpop.f32.mrf.mxu0
      %v295 = vadd.f32 %v248, %v294
      %296 = vdwg.mxu0
      %297 = vst [vmem:[#allocation1] ss:$2 sm:$0xff] %v182
      %v298 = vld.sshfl [vmem:[#allocation1] sm:$0xff pattern:$0x75316420]
      %v299 = vld.sshfl [vmem:[#allocation1 + $0x8] sm:$0xff pattern:$0x75316420]
      %300 = vrot.lane.b32.xlu0 %v298, 112
      %v301 = vpop.permute.xlu0 %300
      %302 = vrot.lane.b32.xlu0 %v299, 112
      %v303 = vpop.permute.xlu0 %302
      %vm304 = vcmask 916480
      %v305 = vsel %vm304, %v301, %v303
      %v307 = vsel %vm304, %v303, 0.0
      %308 = vrot.lane.b32.xlu0 %v183, 120
      %v309 = vpop.permute.xlu0 %308
      %v310 = vsel %vm202, %v309, 0
      %v312 = vsel %vm205, %v305, 0
      %v315 = vsel %vm205, %v307, 0
      %317 = vmatpush.msra.mxu0 0.0
      %318 = vmatpush.msra.mxu0 0.0
      %319 = vmatpush.msra.mxu0 0.0
      %320 = vmatpush.msra.mxu0 0.0
      %321 = vmatpush.msra.mxu0 0.0
      %322 = vmatpush.msra.mxu0 0.0
      %323 = vmatpush.msra.mxu0 0.0
      %324 = vmatpush.msra.mxu0 0.0
      %325 = vmatpush.msra.mxu0 0.0
      %326 = vmatpush.msra.mxu0 0.0
      %327 = vmatpush.msra.mxu0 0.0
      %328 = vmatpush.msra.mxu0 0.0
      %329 = vmatpush.msra.mxu0 0.0
      %330 = vmatpush.msra.mxu0 0.0
      %331 = vmatpush.msra.mxu0 0.0
      %332 = vmatpush.msra.mxu0 %v312
      %333 = vmatmul.f32.gmra.mxu0 %v310
      %v334 = vpop.f32.mrf.mxu0
      %v335 = vadd.f32 0.0, %v334
      %336 = vdwg.mxu0
      %337 = vmatpush.msra.mxu0 0.0
      %338 = vmatpush.msra.mxu0 0.0
      %339 = vmatpush.msra.mxu0 0.0
      %340 = vmatpush.msra.mxu0 0.0
      %341 = vmatpush.msra.mxu0 0.0
      %342 = vmatpush.msra.mxu0 0.0
      %343 = vmatpush.msra.mxu0 0.0
      %344 = vmatpush.msra.mxu0 0.0
      %345 = vmatpush.msra.mxu0 0.0
      %346 = vmatpush.msra.mxu0 0.0
      %347 = vmatpush.msra.mxu0 0.0
      %348 = vmatpush.msra.mxu0 0.0
      %349 = vmatpush.msra.mxu0 0.0
      %350 = vmatpush.msra.mxu0 0.0
      %351 = vmatpush.msra.mxu0 0.0
      %352 = vmatpush.msra.mxu0 %v315
      %353 = vmatmul.f32.gmra.mxu0 %v310
      %v354 = vpop.f32.mrf.mxu0
      %v355 = vadd.f32 0.0, %v354
      %356 = vdwg.mxu0
      %v357 = vadd.f32 %v275, %v335
      %v358 = vadd.f32 %v295, %v355
      %359 = vst [vmem:[%s177] sm:$0xff] %v357
      %360 = vst [vmem:[%s177 + $0x8] sm:$0xff] %v358
      %v361 = vadd.f32 %v357, 0.0
      %v362 = vadd.f32 %v358, 0.0
      %v363 = vmul.f32 %v357, %v357
      %v364 = vmul.f32 %v358, %v358
      %v365 = vadd.f32 %v363, 0.0
      %v366 = vadd.f32 %v364, 0.0
      %v367 = vadd.f32 %v361, %v362
      %368 = vadd.xlane.f32.xlu0 %v367
      %v369 = vpop.xlane.xlu0 %368
      %v370 = vadd.f32 %v365, %v366
      %371 = vadd.xlane.f32.xlu0 %v370
      %v372 = vpop.xlane.xlu0 %371
      %vm373 = vcmask 7168
      %v374 = vsel %vm373, %v369, %v372
      %vm375 = vcmask 15360
      %376 = vst.msk [vmem:[%s181] sm:$0xff] %vm375, %v374
      %p377 = scmp.lt.s32.totalorder %s15, 1
      %s378 = scalar_select %p377, %s15, 1
      %s379 = smul.addr %s378, 2
      %s380 = smul.addr %s379, 8
      %s381 = scalar_lea.vmem %s2, %s380
      %p382 = scmp.lt.s32.totalorder %s15, 1
      %s383 = scalar_select %p382, %s15, 1
      %s384 = smul.addr %s383, 8
      %s385 = scalar_lea.vmem %s3, %s384
      // Predicated region
      $region29: #{temporal_conv_forward.2} parent=27 // pred_check
        %p386 = pneg %p80
      $region30: #{temporal_conv_forward.2} parent=27 // pred_check_branch
        %388 = sbr.rel (%p386) target = $region32
      $region31: #{temporal_conv_forward.2} parent=27 // pred_region
        _
      $region32: #{temporal_conv_forward.2} parent=27 // pred_fallthru
        _
      // Predicated region
      $region33: #{temporal_conv_forward.2} parent=27 // pred_check
        %p389 = pneg %p106
      $region34: #{temporal_conv_forward.2} parent=27 // pred_check_branch
        %391 = sbr.rel (%p389) target = $region36
      $region35: #{temporal_conv_forward.2} parent=27 // pred_region
        _
      $region36: #{temporal_conv_forward.2} parent=27 // pred_fallthru
        _
    $region28: #{temporal_conv_forward.2} parent=5 // pred_fallthru
      _
    %p392 = scmp.le.s32.totalorder 2, %s10
    // Predicated region
    $region37: #{temporal_conv_forward.2} parent=5 // pred_check
      %p393 = pneg %p392
    $region38: #{temporal_conv_forward.2} parent=5 // pred_check_branch
      %395 = sbr.rel (%p393) target = $region40
    $region39: #{temporal_conv_forward.2} parent=5 // pred_region
      %s396 = ssub.s32 %s10, 2
      // Predicated region
      $region41: #{temporal_conv_forward.2} parent=39 // pred_check
        %p397 = pneg %p86
      $region42: #{temporal_conv_forward.2} parent=39 // pred_check_branch
        %399 = sbr.rel (%p397) target = $region44
      $region43: #{temporal_conv_forward.2} parent=39 // pred_region
        %p400 = scmp.lt.s32.totalorder %s16, 1
        %s401 = scalar_select %p400, %s16, 1
        %s402 = smul.addr %s401, 2
        %s403 = smul.addr %s402, 8
        %s404 = scalar_lea.vmem %s2, %s403
      $region44: #{temporal_conv_forward.2} parent=39 // pred_fallthru
        _
      // Predicated region
      $region45: #{temporal_conv_forward.2} parent=39 // pred_check
        %p405 = pneg %p112
      $region46: #{temporal_conv_forward.2} parent=39 // pred_check_branch
        %407 = sbr.rel (%p405) target = $region48
      $region47: #{temporal_conv_forward.2} parent=39 // pred_region
        %p408 = scmp.lt.s32.totalorder %s16, 1
        %s409 = scalar_select %p408, %s16, 1
        %s410 = smul.addr %s409, 8
        %s411 = scalar_lea.vmem %s3, %s410
      $region48: #{temporal_conv_forward.2} parent=39 // pred_fallthru
        _
    $region40: #{temporal_conv_forward.2} parent=5 // pred_fallthru
      _
  $region6: #{temporal_conv_forward.2} parent=0 // loop_footer
    %s14 = sadd.s32 1, %s10
  $region7: #{temporal_conv_forward.2} parent=0 // loop_footer_branch
    %9 = sbr.rel target = $region3
  $region8: #{temporal_conv_forward.2} parent=0 // loop_exit
    _

</llo_original>
